<compile_context>
chip_gen: v6e
topology: v6e:2x2x1
jax: 0.10.0
libtpu: 0.0.40
codegen_flags: <defaults>
</compile_context>

<pallas_src>
import jax
import jax.numpy as jnp
from jax.experimental import pallas as pl
from jax.experimental.pallas import tpu as pltpu


def _round_up(a, b):
    return (a + b - 1) // b * b


def _vmem_budget_bytes():
    """~75% of physical VMEM: ~48 MiB on v7x (64 MiB), ~96 MiB on v5e/v6e."""
    cap = 128 * 2**20
    try:
        info = pltpu.get_tpu_info()
        cap = int(getattr(info, "vmem_capacity_bytes", cap))
    except Exception:
        pass
    return (cap // 4) * 3


def _pick_ff_tile(d_ff, tf_req):
    """Largest multiple of 128 that divides d_ff and is <= tf_req."""
    if d_ff % 128 != 0:
        return d_ff                      # small / odd d_ff: one full-extent block
    best = 128
    t = 256
    while t <= min(tf_req, d_ff):
        if d_ff % t == 0:
            best = t
        t += 128
    return best


def _ffn_kernel_f32(x_ref, w1_ref, b1_ref, w2_ref, b2_ref, o_ref):
    """f32 output: accumulate the d_ff reduction directly into the resident
    output block (its block index is constant along grid axis 1)."""
    f = pl.program_id(1)

    h = jnp.dot(x_ref[...], w1_ref[...], preferred_element_type=jnp.float32)
    h = jnp.maximum(h + b1_ref[...], 0.0)            # linear1 + ReLU
    # dropout(p=0.1): identity (eval-mode semantics)
    part = jnp.dot(h.astype(jnp.bfloat16), w2_ref[...],
                   preferred_element_type=jnp.float32)

    @pl.when(f == 0)
    def _():
        o_ref[...] = part

    @pl.when(f > 0)
    def _():
        o_ref[...] += part

    @pl.when(f == pl.num_programs(1) - 1)
    def _():
        o_ref[...] += b2_ref[...]


def _ffn_kernel_acc(x_ref, w1_ref, b1_ref, w2_ref, b2_ref, o_ref, acc_ref):
    """Non-f32 output: f32 VMEM accumulator, cast + bias on the last step."""
    f = pl.program_id(1)

    @pl.when(f == 0)
    def _():
        acc_ref[...] = jnp.zeros_like(acc_ref)

    h = jnp.dot(x_ref[...], w1_ref[...], preferred_element_type=jnp.float32)
    h = jnp.maximum(h + b1_ref[...], 0.0)            # linear1 + ReLU
    # dropout(p=0.1): identity (eval-mode semantics)
    acc_ref[...] += jnp.dot(h.astype(jnp.bfloat16), w2_ref[...],
                            preferred_element_type=jnp.float32)

    @pl.when(f == pl.num_programs(1) - 1)
    def _():
        o_ref[...] = (acc_ref[...] + b2_ref[...]).astype(o_ref.dtype)


def feed_forward(x, w1, b1, w2, b2, *, tf_req=512):
    """x: (..., d_model). w1: (d_model, d_ff). w2: (d_ff, d_model).

    Pass w1/w2 already in bf16 (one-time cast outside the call path) to avoid
    a per-call convert; f32 weights are accepted and cast defensively.
    """
    d_model = x.shape[-1]
    d_ff = w1.shape[1]
    lead = x.shape[:-1]
    out_dtype = x.dtype
    out_isz = jnp.dtype(out_dtype).itemsize

    # Lane-dense layout: pad feature dim (last dim of x / out) to 128 multiple.
    d_model_pad = max(128, _round_up(d_model, 128))
    dpad = d_model_pad - d_model

    x2d = x.reshape(-1, d_model).astype(jnp.bfloat16)     # bf16 once, in wrapper
    M = x2d.shape[0]

    # ---------------- tile selection (generation-aware VMEM budget) --------
    budget = _vmem_budget_bytes()

    def fits(tm_, tf_):
        wb = 2 * (d_model_pad * tf_ + tf_ * d_model_pad) * 2   # W1+W2 bf16, 2 bufs
        bb = 2 * (tf_ + d_model_pad) * 4                        # biases f32, 2 bufs
        xb = 2 * tm_ * d_model_pad * 2                          # x tile bf16, 2 bufs
        ob = 2 * tm_ * d_model_pad * out_isz                    # out tile, 2 bufs
        ab = 0 if out_dtype == jnp.float32 else tm_ * d_model_pad * 4
        return wb + bb + xb + ob + ab <= budget

    if fits(256, d_ff):
        tf = d_ff          # resident weights: constant block index -> DMA'd once
        tm = 512
    else:
        tf = _pick_ff_tile(d_ff, tf_req)   # stream bounded, lane-aligned blocks
        tm = 1024                          # high flops per streamed weight byte

    tm = min(tm, _round_up(M, 8))
    # Keep >= 2 row tiles when possible so the "parallel" axis feeds both
    # v7x TensorCores.
    if M > 8 and _round_up(M, tm) // tm < 2:
        tm = _round_up((M + 1) // 2, 8)
    # Shrink tiles until the double-buffered footprint fits the VMEM budget.
    while not fits(tm, tf):
        if tm > 128:
            tm = _round_up(tm // 2, 8)
        elif tf > 128 and tf % 256 == 0:
            tf //= 2
        elif tm > 8:
            tm = _round_up(tm // 2, 8)
        else:
            break

    M_pad = _round_up(M, tm)
    n_row, n_ff = M_pad // tm, d_ff // tf

    # ---------------- padding (no-ops when shapes already aligned) ---------
    if M_pad != M:
        x2d = jnp.pad(x2d, ((0, M_pad - M), (0, 0)))
    if dpad:
        x2d = jnp.pad(x2d, ((0, 0), (0, dpad)))

    # NOTE: in a real model, do the bf16 cast / padding once at weight-load
    # time; these are identities when the params are already bf16 and aligned.
    w1b = jnp.pad(w1.astype(jnp.bfloat16), ((0, dpad), (0, 0)))
    w2b = jnp.pad(w2.astype(jnp.bfloat16), ((0, 0), (0, dpad)))
    b1_2d = b1.reshape(1, d_ff).astype(jnp.float32)
    b2_2d = jnp.pad(b2.reshape(1, d_model).astype(jnp.float32),
                    ((0, 0), (0, dpad)))

    f32_out = out_dtype == jnp.float32
    kernel = _ffn_kernel_f32 if f32_out else _ffn_kernel_acc
    scratch = [] if f32_out else [pltpu.VMEM((tm, d_model_pad), jnp.float32)]

    flops = 2 * 2 * M_pad * d_model_pad * d_ff
    weight_reads = 1 if n_ff == 1 else n_row
    bytes_accessed = (x2d.size * 2
                      + M_pad * d_model_pad * out_isz
                      + weight_reads * (w1b.size + w2b.size) * 2
                      + n_row * (b1_2d.size + b2_2d.size) * 4)

    out = pl.pallas_call(
        kernel,
        out_shape=jax.ShapeDtypeStruct((M_pad, d_model_pad), out_dtype),
        grid_spec=pltpu.PrefetchScalarGridSpec(
            num_scalar_prefetch=0,
            grid=(n_row, n_ff),
            in_specs=[
                pl.BlockSpec((tm, d_model_pad), lambda i, f: (i, 0)),  # x rows
                pl.BlockSpec((d_model_pad, tf), lambda i, f: (0, f)),  # W1
                pl.BlockSpec((1, tf),           lambda i, f: (0, f)),  # b1
                pl.BlockSpec((tf, d_model_pad), lambda i, f: (f, 0)),  # W2
                pl.BlockSpec((1, d_model_pad),  lambda i, f: (0, 0)),  # b2
            ],
            out_specs=pl.BlockSpec((tm, d_model_pad), lambda i, f: (i, 0)),
            scratch_shapes=scratch,
        ),
        compiler_params=pltpu.CompilerParams(
            dimension_semantics=("parallel", "arbitrary"),
            vmem_limit_bytes=int(budget)),
        cost_estimate=pl.CostEstimate(
            flops=int(flops), transcendentals=0,
            bytes_accessed=int(bytes_accessed)),
    )(x2d, w1b, b1_2d, w2b, b2_2d)

    out = out[:M, :d_model]
    return out.reshape(*lead, d_model)


def init_params(key, d_model, d_ff, dtype=jnp.float32):
    """Deterministic init mimicking nn.Linear default (uniform +-1/sqrt(fan_in))."""
    k1, k2, k3, k4 = jax.random.split(key, 4)
    bound1 = 1.0 / (d_model ** 0.5)
    bound2 = 1.0 / (d_ff ** 0.5)
    # stored pre-transposed relative to torch's (out, in) convention
    w1 = jax.random.uniform(k1, (d_model, d_ff), dtype, -bound1, bound1)
    b1 = jax.random.uniform(k2, (d_ff,), dtype, -bound1, bound1)
    w2 = jax.random.uniform(k3, (d_ff, d_model), dtype, -bound2, bound2)
    b2 = jax.random.uniform(k4, (d_model,), dtype, -bound2, bound2)
    return w1, b1, w2, b2


if __name__ == "__main__":
    key = jax.random.PRNGKey(0)
    batch, seq, d_model, d_ff = 2, 8, 32, 64

    kx, kp = jax.random.split(key)
    x = jax.random.normal(kx, (batch, seq, d_model), jnp.float32)
    w1, b1, w2, b2 = init_params(kp, d_model, d_ff)

    # One-time weight prep (bf16 MXU operands) outside the per-call path.
    w1b16 = w1.astype(jnp.bfloat16)
    w2b16 = w2.astype(jnp.bfloat16)

    out = feed_forward(x, w1b16, b1, w2b16, b2)
    out = jax.block_until_ready(out)
    assert out.shape == (batch, seq, d_model)

    # Reference with the same bf16-matmul / f32-accumulate recipe.
    x2d = x.reshape(-1, d_model)
    h = jnp.dot(x2d.astype(jnp.bfloat16), w1b16,
                preferred_element_type=jnp.float32) + b1
    h = jnp.maximum(h, 0.0)
    ref = (jnp.dot(h.astype(jnp.bfloat16), w2b16,
                   preferred_element_type=jnp.float32) + b2
           ).reshape(batch, seq, d_model)
    assert jnp.allclose(out, ref, atol=2e-3, rtol=2e-3), \
        float(jnp.max(jnp.abs(out - ref)))

    # Loose sanity check against the pure-f32 math of the PyTorch module (eval).
    ref32 = (jnp.maximum(x2d @ w1 + b1, 0.0) @ w2 + b2).reshape(batch, seq, d_model)
    assert jnp.allclose(out, ref32, atol=5e-2, rtol=5e-2)

    print("KERNEL_OK")
</pallas_src>

<mosaic_0001>
module attributes {stable_mosaic.version = 11 : i64} {
  func.func @_ffn_kernel_f32(%arg0: i32, %arg1: i32, %arg2: memref<8x128xbf16, #tpu.memory_space<vmem>>, %arg3: memref<128x64xbf16, #tpu.memory_space<vmem>>, %arg4: memref<1x64xf32, #tpu.memory_space<vmem>>, %arg5: memref<64x128xbf16, #tpu.memory_space<vmem>>, %arg6: memref<1x128xf32, #tpu.memory_space<vmem>>, %arg7: memref<8x128xf32, #tpu.memory_space<vmem>>) attributes {dimension_semantics = [#tpu.dimension_semantics<parallel>, #tpu.dimension_semantics<arbitrary>], iteration_bounds = array<i64: 2, 1>, scalar_prefetch = 0 : i64, scratch_operands = 0 : i64, tpu.core_type = #tpu.core_type<tc>, window_params = [{transform_indices = @transform_0, window_bounds = array<i64: 8, 128>}, {transform_indices = @transform_1, window_bounds = array<i64: 128, 64>}, {transform_indices = @transform_2, window_bounds = array<i64: 1, 64>}, {transform_indices = @transform_3, window_bounds = array<i64: 64, 128>}, {pipeline_mode = #tpu.pipeline_mode<synchronous>, transform_indices = @transform_4, window_bounds = array<i64: 1, 128>}, {transform_indices = @transform_5, window_bounds = array<i64: 8, 128>}]} {
    %c0 = arith.constant 0 : index
    %c0_0 = arith.constant 0 : index
    %0 = vector.load %arg2[%c0, %c0_0] : memref<8x128xbf16, #tpu.memory_space<vmem>>, vector<8x128xbf16>
    %c0_1 = arith.constant 0 : index
    %c0_2 = arith.constant 0 : index
    %1 = vector.load %arg3[%c0_1, %c0_2] : memref<128x64xbf16, #tpu.memory_space<vmem>>, vector<128x64xbf16>
    %cst = arith.constant dense<0.000000e+00> : vector<8x64xf32>
    %2 = tpu.matmul %0, %1, %cst {dimension_numbers = #tpu.dot_dimension_numbers<[1], [0], [0], [1], [0, 0, 1, 1], [], []>} : vector<8x128xbf16>, vector<128x64xbf16>, vector<8x64xf32> -> vector<8x64xf32>
    %c0_3 = arith.constant 0 : index
    %c0_4 = arith.constant 0 : index
    %3 = vector.load %arg4[%c0_3, %c0_4] : memref<1x64xf32, #tpu.memory_space<vmem>>, vector<1x64xf32>
    %4 = vector.broadcast %3 : vector<1x64xf32> to vector<8x64xf32>
    %5 = arith.addf %2, %4 : vector<8x64xf32>
    %cst_5 = arith.constant 0.000000e+00 : f32
    %6 = vector.broadcast %cst_5 : f32 to vector<8x64xf32>
    %7 = arith.maximumf %5, %6 : vector<8x64xf32>
    %8 = arith.truncf %7 : vector<8x64xf32> to vector<8x64xbf16>
    %c0_6 = arith.constant 0 : index
    %c0_7 = arith.constant 0 : index
    %9 = vector.load %arg5[%c0_6, %c0_7] : memref<64x128xbf16, #tpu.memory_space<vmem>>, vector<64x128xbf16>
    %cst_8 = arith.constant dense<0.000000e+00> : vector<8x128xf32>
    %10 = tpu.matmul %8, %9, %cst_8 {dimension_numbers = #tpu.dot_dimension_numbers<[1], [0], [0], [1], [0, 0, 1, 1], [], []>} : vector<8x64xbf16>, vector<64x128xbf16>, vector<8x128xf32> -> vector<8x128xf32>
    %c0_i32 = arith.constant 0 : i32
    %11 = arith.cmpi eq, %arg1, %c0_i32 : i32
    %12 = arith.extui %11 : i1 to i32
    %c0_i32_9 = arith.constant 0 : i32
    %13 = arith.cmpi ne, %12, %c0_i32_9 : i32
    scf.if %13 {
      %c0_14 = arith.constant 0 : index
      %c0_15 = arith.constant 0 : index
      %20 = vector.load %arg7[%c0_14, %c0_15] : memref<8x128xf32, #tpu.memory_space<vmem>>, vector<8x128xf32>
      tpu.vector_store %arg7[%c0_14, %c0_15], %10 {strides = array<i32>} : memref<8x128xf32, #tpu.memory_space<vmem>>, vector<8x128xf32>,
    } else {
    }
    %c0_i32_10 = arith.constant 0 : i32
    %14 = arith.cmpi sgt, %arg1, %c0_i32_10 : i32
    %15 = arith.extui %14 : i1 to i32
    %c0_i32_11 = arith.constant 0 : i32
    %16 = arith.cmpi ne, %15, %c0_i32_11 : i32
    scf.if %16 {
      %c0_14 = arith.constant 0 : index
      %c0_15 = arith.constant 0 : index
      %20 = vector.load %arg7[%c0_14, %c0_15] : memref<8x128xf32, #tpu.memory_space<vmem>>, vector<8x128xf32>
      %21 = arith.addf %20, %10 : vector<8x128xf32>
      %c0_16 = arith.constant 0 : index
      %c0_17 = arith.constant 0 : index
      %22 = vector.load %arg7[%c0_16, %c0_17] : memref<8x128xf32, #tpu.memory_space<vmem>>, vector<8x128xf32>
      tpu.vector_store %arg7[%c0_16, %c0_17], %21 {strides = array<i32>} : memref<8x128xf32, #tpu.memory_space<vmem>>, vector<8x128xf32>,
    } else {
    }
    %c0_i32_12 = arith.constant 0 : i32
    %17 = arith.cmpi eq, %arg1, %c0_i32_12 : i32
    %18 = arith.extui %17 : i1 to i32
    %c0_i32_13 = arith.constant 0 : i32
    %19 = arith.cmpi ne, %18, %c0_i32_13 : i32
    scf.if %19 {
      %c0_14 = arith.constant 0 : index
      %c0_15 = arith.constant 0 : index
      %20 = vector.load %arg7[%c0_14, %c0_15] : memref<8x128xf32, #tpu.memory_space<vmem>>, vector<8x128xf32>
      %c0_16 = arith.constant 0 : index
      %c0_17 = arith.constant 0 : index
      %21 = vector.load %arg6[%c0_16, %c0_17] : memref<1x128xf32, #tpu.memory_space<vmem>>, vector<1x128xf32>
      %22 = vector.broadcast %21 : vector<1x128xf32> to vector<8x128xf32>
      %23 = arith.addf %20, %22 : vector<8x128xf32>
      %c0_18 = arith.constant 0 : index
      %c0_19 = arith.constant 0 : index
      %24 = vector.load %arg7[%c0_18, %c0_19] : memref<8x128xf32, #tpu.memory_space<vmem>>, vector<8x128xf32>
      tpu.vector_store %arg7[%c0_18, %c0_19], %23 {strides = array<i32>} : memref<8x128xf32, #tpu.memory_space<vmem>>, vector<8x128xf32>,
    } else {
    }
    return
  }
  func.func @transform_0(%arg0: i32, %arg1: i32) -> (i32, i32) {
    %c0_i32 = arith.constant 0 : i32
    %c0_i32_0 = arith.constant 0 : i32
    return %arg0, %c0_i32 : i32, i32
  }
  func.func @transform_1(%arg0: i32, %arg1: i32) -> (i32, i32) {
    %c0_i32 = arith.constant 0 : i32
    %c0_i32_0 = arith.constant 0 : i32
    return %c0_i32, %arg1 : i32, i32
  }
  func.func @transform_2(%arg0: i32, %arg1: i32) -> (i32, i32) {
    %c0_i32 = arith.constant 0 : i32
    %c0_i32_0 = arith.constant 0 : i32
    return %c0_i32, %arg1 : i32, i32
  }
  func.func @transform_3(%arg0: i32, %arg1: i32) -> (i32, i32) {
    %c0_i32 = arith.constant 0 : i32
    %c0_i32_0 = arith.constant 0 : i32
    return %arg1, %c0_i32 : i32, i32
  }
  func.func @transform_4(%arg0: i32, %arg1: i32) -> (i32, i32) {
    %c0_i32 = arith.constant 0 : i32
    %c0_i32_0 = arith.constant 0 : i32
    %c0_i32_1 = arith.constant 0 : i32
    return %c0_i32, %c0_i32_0 : i32, i32
  }
  func.func @transform_5(%arg0: i32, %arg1: i32) -> (i32, i32) {
    %c0_i32 = arith.constant 0 : i32
    %c0_i32_0 = arith.constant 0 : i32
    return %arg0, %c0_i32 : i32, i32
  }
}

</mosaic_0001>

<llo_original>
// kernel: tpu_custom_call.1
$region0: #{tpu_custom_call.1}
  #allocation0 [shape = 'u32[]', space=smem, size = 0x4, offset = 0x4, fixed_abs, tag = 'smem constant byte address 0x4 - core index']
  #allocation1 [shape = 'u32[144,128]{1,0:T(1,128)}', space=vmem, size = 0x12000, scoped, tag = 'internal scratch']
  %s0 = inlined_call_operand.vmem [shape: bf16[16,128], index: 0, kind: input, shape index: {}]
  %s1 = inlined_call_operand.vmem [shape: bf16[128,64], index: 1, kind: input, shape index: {}]
  %s2 = inlined_call_operand.vmem [shape: f32[1,64], index: 2, kind: input, shape index: {}]
  %s3 = inlined_call_operand.vmem [shape: bf16[64,128], index: 3, kind: input, shape index: {}]
  %s4 = inlined_call_operand.vmem [shape: f32[1,128], index: 4, kind: input, shape index: {}]
  %s5 = inlined_call_operand.hbm [shape: f32[16,128], index: 5, kind: output, shape index: {}]
  %s6 = sld [smem:[#allocation0]]
  $region65: #{tpu_custom_call.1} parent=0
    _
  %s8 = ssub.s32 1, %s6
  %s9 = scalar_select 0, %s8, %s6
  $region1: #{tpu_custom_call.1} parent=0
    #allocation2 [shape = 'u8[8192]{0}', space=vmem, size = 0x2000, scoped, tag = 'output window, operand 0']
    #allocation3 [shape = 's32[2]{0}', space=sflag, size = 0x8, scoped, tag = 'scoped memory for tpu_custom_call.1']
    %10 = vsyncpa [#allocation3], 0
    %s11 = scalar_lea.sflag [#allocation3], 1
    %12 = vsyncpa %s11, 0
    loop: start=0, step=1, limit=4
    $region2: #{tpu_custom_call.1} parent=1 // loop_pre_header
      _
    $region3: #{tpu_custom_call.1} parent=1 // loop_header
      %s14 = sphi 0, %s18
      %p15 = scmp.ge.s32.totalorder %s14, 4
      %s21 = sphi 0, %s33
      %s22 = sphi 0, %s29
      %s23 = sphi 0, %s21
      %s24 = sphi 0, %s22
      %s25 = sphi 0, %s23
      %s26 = sphi 0, %s24
      %s36 = sphi 0, %s38
      %s39 = sphi 0, %s36
      %s40 = sphi 0, %s39
      %s56 = sphi 0, %s40
      %s62 = sphi 0, %s64
      %s65 = sphi 0, %s62
      %s66 = sphi 0, %s65
      %s82 = sphi 0, %s66
      %s88 = sphi 0, %s90
      %s91 = sphi 0, %s88
      %s92 = sphi 0, %s91
      %s108 = sphi 0, %s92
      %s114 = sphi 0, %s116
      %s117 = sphi 0, %s114
      %s118 = sphi 0, %s117
      %s134 = sphi 0, %s118
      %s138 = sphi 0, %s138
      %s140 = sphi 0, %s138
      %s141 = sphi 0, %s140
      %s155 = sphi 0, %s141
      %s161 = sphi 0, %s163
      %s164 = sphi 0, %s161
      %s165 = sphi 0, %s164
      %s181 = sphi 0, %s165
    $region4: #{tpu_custom_call.1} parent=1 // loop_header_branch
      %17 = sbr.rel (%p15) target = $region8
    $region5: #{tpu_custom_call.1} parent=1 // loop_body
      %s19 = ssub.s32 %s14, 1
      %s20 = ssub.s32 %s14, 2
      %s27 = sadd.s32 1, %s22
      %p28 = scmp.ge.s32.totalorder %s27, 1
      %s29 = scalar_select %p28, 0, %s27
      %s30 = sadd.s32 1, %s21
      %s31 = scalar_select %p28, %s30, %s21
      %p32 = scmp.ge.s32.totalorder %s31, 2
      %s33 = scalar_select %p32, 0, %s31
      %s34 = ssub.s32 %s21, %s33
      %p35 = scmp.eq.s32.totalorder %s34, 0
      %s37 = sadd.s32 %s36, 1
      %s38 = scalar_select %p35, %s36, %s37
      %p41 = pneg %p35
      %p42 = scmp.eq.s32.totalorder %s14, 1
      %p43 = por %p41, %p42
      %p44 = scmp.ne.s32.totalorder %s36, %s39
      %p45 = scmp.eq.s32.totalorder %s14, 0
      %p46 = por %p44, %p45
      %p47 = scmp.ne.s32.totalorder %s36, %s39
      %p48 = scmp.eq.s32.totalorder %s19, 1
      %p49 = por %p47, %p48
      %p50 = scmp.ne.s32.totalorder %s39, %s40
      %p51 = scmp.eq.s32.totalorder %s19, 0
      %p52 = por %p50, %p51
      %p53 = scmp.ne.s32.totalorder %s39, %s40
      %p54 = scmp.eq.s32.totalorder %s20, 1
      %p55 = por %p53, %p54
      %p57 = scmp.ne.s32.totalorder %s40, %s56
      %p58 = scmp.eq.s32.totalorder %s20, 0
      %p59 = por %p57, %p58
      %s60 = ssub.s32 %s22, %s29
      %p61 = scmp.eq.s32.totalorder %s60, 0
      %s63 = sadd.s32 %s62, 1
      %s64 = scalar_select %p61, %s62, %s63
      %p67 = pneg %p61
      %p68 = scmp.eq.s32.totalorder %s14, 1
      %p69 = por %p67, %p68
      %p70 = scmp.ne.s32.totalorder %s62, %s65
      %p71 = scmp.eq.s32.totalorder %s14, 0
      %p72 = por %p70, %p71
      %p73 = scmp.ne.s32.totalorder %s62, %s65
      %p74 = scmp.eq.s32.totalorder %s19, 1
      %p75 = por %p73, %p74
      %p76 = scmp.ne.s32.totalorder %s65, %s66
      %p77 = scmp.eq.s32.totalorder %s19, 0
      %p78 = por %p76, %p77
      %p79 = scmp.ne.s32.totalorder %s65, %s66
      %p80 = scmp.eq.s32.totalorder %s20, 1
      %p81 = por %p79, %p80
      %p83 = scmp.ne.s32.totalorder %s66, %s82
      %p84 = scmp.eq.s32.totalorder %s20, 0
      %p85 = por %p83, %p84
      %s86 = ssub.s32 %s22, %s29
      %p87 = scmp.eq.s32.totalorder %s86, 0
      %s89 = sadd.s32 %s88, 1
      %s90 = scalar_select %p87, %s88, %s89
      %p93 = pneg %p87
      %p94 = scmp.eq.s32.totalorder %s14, 1
      %p95 = por %p93, %p94
      %p96 = scmp.ne.s32.totalorder %s88, %s91
      %p97 = scmp.eq.s32.totalorder %s14, 0
      %p98 = por %p96, %p97
      %p99 = scmp.ne.s32.totalorder %s88, %s91
      %p100 = scmp.eq.s32.totalorder %s19, 1
      %p101 = por %p99, %p100
      %p102 = scmp.ne.s32.totalorder %s91, %s92
      %p103 = scmp.eq.s32.totalorder %s19, 0
      %p104 = por %p102, %p103
      %p105 = scmp.ne.s32.totalorder %s91, %s92
      %p106 = scmp.eq.s32.totalorder %s20, 1
      %p107 = por %p105, %p106
      %p109 = scmp.ne.s32.totalorder %s92, %s108
      %p110 = scmp.eq.s32.totalorder %s20, 0
      %p111 = por %p109, %p110
      %s112 = ssub.s32 %s22, %s29
      %p113 = scmp.eq.s32.totalorder %s112, 0
      %s115 = sadd.s32 %s114, 1
      %s116 = scalar_select %p113, %s114, %s115
      %p119 = pneg %p113
      %p120 = scmp.eq.s32.totalorder %s14, 1
      %p121 = por %p119, %p120
      %p122 = scmp.ne.s32.totalorder %s114, %s117
      %p123 = scmp.eq.s32.totalorder %s14, 0
      %p124 = por %p122, %p123
      %p125 = scmp.ne.s32.totalorder %s114, %s117
      %p126 = scmp.eq.s32.totalorder %s19, 1
      %p127 = por %p125, %p126
      %p128 = scmp.ne.s32.totalorder %s117, %s118
      %p129 = scmp.eq.s32.totalorder %s19, 0
      %p130 = por %p128, %p129
      %p131 = scmp.ne.s32.totalorder %s117, %s118
      %p132 = scmp.eq.s32.totalorder %s20, 1
      %p133 = por %p131, %p132
      %p135 = scmp.ne.s32.totalorder %s118, %s134
      %p136 = scmp.eq.s32.totalorder %s20, 0
      %p137 = por %p135, %p136
      %s139 = sadd.s32 %s138, 1
      %p142 = scmp.eq.s32.totalorder %s14, 1
      %p143 = scmp.ne.s32.totalorder %s138, %s140
      %p144 = scmp.eq.s32.totalorder %s14, 0
      %p145 = por %p143, %p144
      %p146 = scmp.ne.s32.totalorder %s138, %s140
      %p147 = scmp.eq.s32.totalorder %s19, 1
      %p148 = por %p146, %p147
      %p149 = scmp.ne.s32.totalorder %s140, %s141
      %p150 = scmp.eq.s32.totalorder %s19, 0
      %p151 = por %p149, %p150
      %p152 = scmp.ne.s32.totalorder %s140, %s141
      %p153 = scmp.eq.s32.totalorder %s20, 1
      %p154 = por %p152, %p153
      %p156 = scmp.ne.s32.totalorder %s141, %s155
      %p157 = scmp.eq.s32.totalorder %s20, 0
      %p158 = por %p156, %p157
      %s159 = ssub.s32 %s21, %s33
      %p160 = scmp.eq.s32.totalorder %s159, 0
      %s162 = sadd.s32 %s161, 1
      %s163 = scalar_select %p160, %s161, %s162
      %p166 = pneg %p160
      %p167 = scmp.eq.s32.totalorder %s14, 1
      %p168 = por %p166, %p167
      %p169 = scmp.ne.s32.totalorder %s161, %s164
      %p170 = scmp.eq.s32.totalorder %s14, 0
      %p171 = por %p169, %p170
      %p172 = scmp.ne.s32.totalorder %s161, %s164
      %p173 = scmp.eq.s32.totalorder %s19, 1
      %p174 = por %p172, %p173
      %p175 = scmp.ne.s32.totalorder %s164, %s165
      %p176 = scmp.eq.s32.totalorder %s19, 0
      %p177 = por %p175, %p176
      %p178 = scmp.ne.s32.totalorder %s164, %s165
      %p179 = scmp.eq.s32.totalorder %s20, 1
      %p180 = por %p178, %p179
      %p182 = scmp.ne.s32.totalorder %s165, %s181
      %p183 = scmp.eq.s32.totalorder %s20, 0
      %p184 = por %p182, %p183
      %p185 = scmp.le.s32.totalorder 1, %s14
      %p186 = scmp.lt.s32.totalorder %s14, 3
      %p187 = pnand %p185, %p186
      %p188 = pneg %p187
      // Predicated region
      $region9: #{tpu_custom_call.1} parent=5 // pred_check
        _
      $region10: #{tpu_custom_call.1} parent=5 // pred_check_branch
        %190 = sbr.rel (%p187) target = $region12
      $region11: #{tpu_custom_call.1} parent=5 // pred_region
        %s191 = ssub.s32 %s14, 1
        // Predicated region
        $region13: #{tpu_custom_call.1} parent=11 // pred_check
          %p192 = pneg %p78
        $region14: #{tpu_custom_call.1} parent=11 // pred_check_branch
          %194 = sbr.rel (%p192) target = $region16
        $region15: #{tpu_custom_call.1} parent=11 // pred_region
          %p195 = scmp.lt.s32.totalorder %s24, 0
          %s196 = scalar_select %p195, %s24, 0
          %s197 = smul.addr %s196, 4
          %s198 = scalar_lea.vmem %s1, %s197
        $region16: #{tpu_custom_call.1} parent=11 // pred_fallthru
          _
        // Predicated region
        $region17: #{tpu_custom_call.1} parent=11 // pred_check
          %p199 = pneg %p104
        $region18: #{tpu_custom_call.1} parent=11 // pred_check_branch
          %201 = sbr.rel (%p199) target = $region20
        $region19: #{tpu_custom_call.1} parent=11 // pred_region
          %p202 = scmp.lt.s32.totalorder %s24, 0
          %s203 = scalar_select %p202, %s24, 0
          %s204 = scalar_lea.vmem %s2, %s203
        $region20: #{tpu_custom_call.1} parent=11 // pred_fallthru
          _
        // Predicated region
        $region21: #{tpu_custom_call.1} parent=11 // pred_check
          %p205 = pneg %p130
        $region22: #{tpu_custom_call.1} parent=11 // pred_check_branch
          %207 = sbr.rel (%p205) target = $region24
        $region23: #{tpu_custom_call.1} parent=11 // pred_region
          %s208 = smul.u32 8, %s24
          %p209 = scmp.lt.s32.totalorder %s208, 7
          %s210 = scalar_select %p209, %s208, 7
          %s211 = smul.addr %s210, 4
          %s212 = scalar_lea.vmem %s3, %s211
          %s213 = smul.u32 8, %s24
        $region24: #{tpu_custom_call.1} parent=11 // pred_fallthru
          _
        // Predicated region
        $region25: #{tpu_custom_call.1} parent=11 // pred_check
          %p214 = pneg %p151
        $region26: #{tpu_custom_call.1} parent=11 // pred_check_branch
          %216 = sbr.rel (%p214) target = $region28
        $region27: #{tpu_custom_call.1} parent=11 // pred_region
          _
        $region28: #{tpu_custom_call.1} parent=11 // pred_fallthru
          _
      $region12: #{tpu_custom_call.1} parent=5 // pred_fallthru
        _
      %p217 = scmp.lt.s32.totalorder %s14, 2
      // Predicated region
      $region29: #{tpu_custom_call.1} parent=5 // pred_check
        %p218 = pneg %p217
      $region30: #{tpu_custom_call.1} parent=5 // pred_check_branch
        %220 = sbr.rel (%p218) target = $region32
      $region31: #{tpu_custom_call.1} parent=5 // pred_region
        // Predicated region
        $region33: #{tpu_custom_call.1} parent=31 // pred_check
          %p221 = pneg %p46
        $region34: #{tpu_custom_call.1} parent=31 // pred_check_branch
          %223 = sbr.rel (%p221) target = $region36
        $region35: #{tpu_custom_call.1} parent=31 // pred_region
          %p224 = scmp.lt.s32.totalorder %s21, 1
          %s225 = scalar_select %p224, %s21, 1
          %s226 = smul.addr %s225, 4
          %s227 = scalar_lea.vmem %s0, %s226
        $region36: #{tpu_custom_call.1} parent=31 // pred_fallthru
          _
      $region32: #{tpu_custom_call.1} parent=5 // pred_fallthru
        _
      %p228 = scmp.le.s32.totalorder 1, %s14
      %p229 = scmp.lt.s32.totalorder %s14, 3
      %p230 = pnand %p228, %p229
      %p231 = pneg %p230
      // Predicated region
      $region37: #{tpu_custom_call.1} parent=5 // pred_check
        _
      $region38: #{tpu_custom_call.1} parent=5 // pred_check_branch
        %233 = sbr.rel (%p230) target = $region40
      $region39: #{tpu_custom_call.1} parent=5 // pred_region
        %s234 = ssub.s32 %s14, 1
        %p235 = scmp.lt.s32.totalorder %s23, 1
        %s236 = scalar_select %p235, %s23, 1
        %s237 = smul.addr %s236, 4
        %s238 = scalar_lea.vmem %s0, %s237
        %p239 = pneg %p52
        %p240 = pneg %p49
        %p241 = scmp.lt.s32.totalorder %s24, 0
        %s242 = scalar_select %p241, %s24, 0
        %s243 = smul.addr %s242, 4
        %s244 = scalar_lea.vmem %s1, %s243
        %p245 = pneg %p78
        %p246 = pneg %p75
        %p247 = scmp.lt.s32.totalorder %s24, 0
        %s248 = scalar_select %p247, %s24, 0
        %s249 = scalar_lea.vmem %s2, %s248
        %p250 = pneg %p104
        %p251 = pneg %p101
        %s252 = smul.u32 8, %s24
        %p253 = scmp.lt.s32.totalorder %s252, 7
        %s254 = scalar_select %p253, %s252, 7
        %s255 = smul.addr %s254, 4
        %s256 = scalar_lea.vmem %s3, %s255
        %p257 = pneg %p130
        %p258 = pneg %p127
        %p259 = pneg %p151
        %p260 = pneg %p148
        %p261 = pneg %p177
        %p262 = pneg %p174
        %s263 = sand.u32 %s164, 1
        %s264 = scalar_lea.sflag [#allocation3], %s263
        %s265 = sand.u32 %s164, 1
        %s266 = smul.addr %s265, 8
        %s267 = scalar_lea.vmem [#allocation2], %s266
        %p268 = scmp.lt.s32.totalorder %s23, 1
        %s269 = scalar_select %p268, %s23, 1
        %s270 = smul.addr %s269, 4
        %s271 = scalar_lea.vmem %s0, %s270
        %p272 = scmp.lt.s32.totalorder %s24, 0
        %s273 = scalar_select %p272, %s24, 0
        %s274 = smul.addr %s273, 4
        %s275 = scalar_lea.vmem %s1, %s274
        %p276 = scmp.lt.s32.totalorder %s24, 0
        %s277 = scalar_select %p276, %s24, 0
        %s278 = scalar_lea.vmem %s2, %s277
        %s279 = smul.u32 8, %s24
        %p280 = scmp.lt.s32.totalorder %s279, 7
        %s281 = scalar_select %p280, %s279, 7
        %s282 = smul.addr %s281, 4
        %s283 = scalar_lea.vmem %s3, %s282
        %s284 = smul.u32 8, %s24
        %v286 = vld [vmem:[%s271] sm:$0xf]
        %v287 = vld [vmem:[%s275] sm:$0xf]
        %v288 = vld [vmem:[%s275 + $0x4] sm:$0xf]
        %v289 = vld [vmem:[%s275 + $0x8] sm:$0xf]
        %v290 = vld [vmem:[%s275 + $0xc] sm:$0xf]
        %v291 = vld [vmem:[%s275 + $0x10] sm:$0xf]
        %v292 = vld [vmem:[%s275 + $0x14] sm:$0xf]
        %v293 = vld [vmem:[%s275 + $0x18] sm:$0xf]
        %v294 = vld [vmem:[%s275 + $0x1c] sm:$0xf]
        %v295 = vld [vmem:[%s275 + $0x20] sm:$0xf]
        %v296 = vld [vmem:[%s275 + $0x24] sm:$0xf]
        %v297 = vld [vmem:[%s275 + $0x28] sm:$0xf]
        %v298 = vld [vmem:[%s275 + $0x2c] sm:$0xf]
        %v299 = vld [vmem:[%s275 + $0x30] sm:$0xf]
        %v300 = vld [vmem:[%s275 + $0x34] sm:$0xf]
        %v301 = vld [vmem:[%s275 + $0x38] sm:$0xf]
        %v302 = vld [vmem:[%s275 + $0x3c] sm:$0xf]
        %v303 = vld [vmem:[%s278] sm:$0x1]
        %v305 = vlaneseq
        %v306 = vshrl.u32 %v305, 7
        %v307 = vsub.s32 0, %v306
        %v308 = vrot.slane %v303, %v307
        %v326 = vunpack.c.l.b16 %v287
        %v327 = vunpack.c.l.b16 %v288
        %v328 = vunpack.c.l.b16 %v289
        %v329 = vunpack.c.l.b16 %v290
        %v330 = vunpack.c.l.b16 %v291
        %v331 = vunpack.c.l.b16 %v292
        %v332 = vunpack.c.l.b16 %v293
        %v333 = vunpack.c.l.b16 %v294
        %v334 = vunpack.c.l.b16 %v295
        %v335 = vunpack.c.l.b16 %v296
        %v336 = vunpack.c.l.b16 %v297
        %v337 = vunpack.c.l.b16 %v298
        %v338 = vunpack.c.l.b16 %v299
        %v339 = vunpack.c.l.b16 %v300
        %v340 = vunpack.c.l.b16 %v301
        %v341 = vunpack.c.l.b16 %v302
        %v342 = vpack.c.b16 %v327, %v326
        %v343 = vpack.c.b16 %v329, %v328
        %v344 = vpack.c.b16 %v331, %v330
        %v345 = vpack.c.b16 %v333, %v332
        %v346 = vpack.c.b16 %v335, %v334
        %v347 = vpack.c.b16 %v337, %v336
        %v348 = vpack.c.b16 %v339, %v338
        %v349 = vpack.c.b16 %v341, %v340
        %358 = vmatprep.subr.bf16.mxu0 0
        %359 = vmatpush1.bf16.msra.mxu0 %v349
        %360 = vmatprep.subr.bf16.mxu0 0
        %361 = vmatpush1.bf16.msra.mxu0 %v348
        %362 = vmatprep.subr.bf16.mxu0 0
        %363 = vmatpush1.bf16.msra.mxu0 %v347
        %364 = vmatprep.subr.bf16.mxu0 0
        %365 = vmatpush1.bf16.msra.mxu0 %v346
        %366 = vmatprep.subr.bf16.mxu0 0
        %367 = vmatpush1.bf16.msra.mxu0 %v345
        %368 = vmatprep.subr.bf16.mxu0 0
        %369 = vmatpush1.bf16.msra.mxu0 %v344
        %370 = vmatprep.subr.bf16.mxu0 0
        %371 = vmatpush1.bf16.msra.mxu0 %v343
        %372 = vmatprep.subr.bf16.mxu0 0
        %373 = vmatpush1.bf16.msra.mxu0 %v342
        %374 = vmatprep.subr.bf16.mxu0 0
        %375 = vmatpush2.bf16.msra.mxu0 0
        %376 = vmatprep.subr.bf16.mxu0 0
        %377 = vmatpush2.bf16.msra.mxu0 0
        %378 = vmatprep.subr.bf16.mxu0 0
        %379 = vmatpush2.bf16.msra.mxu0 0
        %380 = vmatprep.subr.bf16.mxu0 0
        %381 = vmatpush2.bf16.msra.mxu0 0
        %382 = vmatprep.subr.bf16.mxu0 0
        %383 = vmatpush2.bf16.msra.mxu0 0
        %384 = vmatprep.subr.bf16.mxu0 0
        %385 = vmatpush2.bf16.msra.mxu0 0
        %386 = vmatprep.subr.bf16.mxu0 0
        %387 = vmatpush2.bf16.msra.mxu0 0
        %388 = vmatprep.subr.bf16.mxu0 0
        %389 = vmatpush2.bf16.msra.mxu0 0
        %390 = vmatprep.mubr.bf16.mxu0 0
        %391 = vmatmul.mubr.bf16.gmra.mxu0 %v286
        %v392 = vpop.f32.mrf.mxu0
        %v393 = vadd.f32 %v308, %v392
        %v394 = vpop.f32.mrf.mxu0
        %v395 = vpop.f32.mrf.mxu0
        %v396 = vpop.f32.mrf.mxu0
        %397 = vdwg.mxu0
        %v398 = vmax.f32 %v393, 0.0
        %v399 = vpack.c.bf16 %v398, %v398
        %v400 = vld [vmem:[%s283] sm:$0xf]
        %v401 = vld [vmem:[%s283 + $0x4] sm:$0xf]
        %v402 = vld [vmem:[%s283 + $0x8] sm:$0xf]
        %v403 = vld [vmem:[%s283 + $0xc] sm:$0xf]
        %v404 = vld [vmem:[%s283 + $0x10] sm:$0xf]
        %v405 = vld [vmem:[%s283 + $0x14] sm:$0xf]
        %v406 = vld [vmem:[%s283 + $0x18] sm:$0xf]
        %v407 = vld [vmem:[%s283 + $0x1c] sm:$0xf]
        %v416 = vunpack.c.l.b16 %v400
        %v417 = vunpack.c.l.b16 %v401
        %v418 = vunpack.c.l.b16 %v402
        %v419 = vunpack.c.l.b16 %v403
        %v420 = vunpack.c.l.b16 %v404
        %v421 = vunpack.c.l.b16 %v405
        %v422 = vunpack.c.l.b16 %v406
        %v423 = vunpack.c.l.b16 %v407
        %v424 = vpack.c.b16 %v417, %v416
        %v425 = vpack.c.b16 %v419, %v418
        %v426 = vpack.c.b16 %v421, %v420
        %v427 = vpack.c.b16 %v423, %v422
        %vm432 = vcmask 523264
        %v434 = vsel %vm432, %v399, 0
        %436 = vmatprep.subr.bf16.mxu0 0
        %437 = vmatpush1.bf16.msra.mxu0 0
        %438 = vmatprep.subr.bf16.mxu0 0
        %439 = vmatpush1.bf16.msra.mxu0 0
        %440 = vmatprep.subr.bf16.mxu0 0
        %441 = vmatpush1.bf16.msra.mxu0 0
        %442 = vmatprep.subr.bf16.mxu0 0
        %443 = vmatpush1.bf16.msra.mxu0 0
        %444 = vmatprep.subr.bf16.mxu0 0
        %445 = vmatpush1.bf16.msra.mxu0 %v427
        %446 = vmatprep.subr.bf16.mxu0 0
        %447 = vmatpush1.bf16.msra.mxu0 %v426
        %448 = vmatprep.subr.bf16.mxu0 0
        %449 = vmatpush1.bf16.msra.mxu0 %v425
        %450 = vmatprep.subr.bf16.mxu0 0
        %451 = vmatpush1.bf16.msra.mxu0 %v424
        %452 = vmatprep.subr.bf16.mxu0 0
        %453 = vmatpush2.bf16.msra.mxu0 0
        %454 = vmatprep.subr.bf16.mxu0 0
        %455 = vmatpush2.bf16.msra.mxu0 0
        %456 = vmatprep.subr.bf16.mxu0 0
        %457 = vmatpush2.bf16.msra.mxu0 0
        %458 = vmatprep.subr.bf16.mxu0 0
        %459 = vmatpush2.bf16.msra.mxu0 0
        %460 = vmatprep.subr.bf16.mxu0 0
        %461 = vmatpush2.bf16.msra.mxu0 0
        %462 = vmatprep.subr.bf16.mxu0 0
        %463 = vmatpush2.bf16.msra.mxu0 0
        %464 = vmatprep.subr.bf16.mxu0 0
        %465 = vmatpush2.bf16.msra.mxu0 0
        %466 = vmatprep.subr.bf16.mxu0 0
        %467 = vmatpush2.bf16.msra.mxu0 0
        %468 = vmatprep.mubr.bf16.mxu0 0
        %469 = vmatmul.mubr.bf16.gmra.mxu0 %v434
        %v470 = vpop.f32.mrf.mxu0
        %v471 = vadd.f32 0.0, %v470
        %v472 = vpop.f32.mrf.mxu0
        %v473 = vpop.f32.mrf.mxu0
        %v474 = vpop.f32.mrf.mxu0
        %475 = vdwg.mxu0
        %p476 = scmp.eq.s32.totalorder %s24, 0
        // Predicated region
        $region41: #{tpu_custom_call.1} parent=39 // pred_check
          %p477 = pneg %p476
        $region42: #{tpu_custom_call.1} parent=39 // pred_check_branch
          %479 = sbr.rel (%p477) target = $region44
        $region43: #{tpu_custom_call.1} parent=39 // pred_region
          %480 = vst [vmem:[%s267] sm:$0xff] %v471
        $region44: #{tpu_custom_call.1} parent=39 // pred_fallthru
          _
        %p481 = scmp.gt.s32.totalorder %s24, 0
        // Predicated region
        $region45: #{tpu_custom_call.1} parent=39 // pred_check
          %p482 = pneg %p481
        $region46: #{tpu_custom_call.1} parent=39 // pred_check_branch
          %484 = sbr.rel (%p482) target = $region48
        $region47: #{tpu_custom_call.1} parent=39 // pred_region
          %v485 = vld [vmem:[%s267] sm:$0xff]
          %v486 = vadd.f32 %v485, %v471
          %487 = vst [vmem:[%s267] sm:$0xff] %v486
        $region48: #{tpu_custom_call.1} parent=39 // pred_fallthru
          _
        // Predicated region
        $region49: #{tpu_custom_call.1} parent=39 // pred_check
          %p488 = pneg %p476
        $region50: #{tpu_custom_call.1} parent=39 // pred_check_branch
          %490 = sbr.rel (%p488) target = $region52
        $region51: #{tpu_custom_call.1} parent=39 // pred_region
          %v491 = vld [vmem:[%s267] sm:$0xff]
          %v492 = vld [vmem:[%s4] sm:$0x1]
          %v494 = vlaneseq
          %v495 = vshrl.u32 %v494, 7
          %v496 = vsub.s32 0, %v495
          %v497 = vrot.slane %v492, %v496
          %v499 = vadd.f32 %v491, %v497
          %500 = vst [vmem:[%s267] sm:$0xff] %v499
        $region52: #{tpu_custom_call.1} parent=39 // pred_fallthru
          _
        %s501 = sand.u32 %s164, 1
        %s502 = scalar_lea.sflag [#allocation3], %s501
        %s503 = sand.u32 %s164, 1
        %s504 = smul.addr %s503, 8
        %s505 = scalar_lea.vmem [#allocation2], %s504
        // Predicated region
        $region53: #{tpu_custom_call.1} parent=39 // pred_check
          %p506 = pneg %p174
        $region54: #{tpu_custom_call.1} parent=39 // pred_check_branch
          %508 = sbr.rel (%p506) target = $region56
        $region55: #{tpu_custom_call.1} parent=39 // pred_region
          %s510 = ssub.s32 128, 128
          %511 = vsyncadd %s502, %s510
          %s512 = smul.addr %s23, 128
          %s513 = scalar_lea.hbm %s5, %s512
          %s515 = sshll.u32 %s505, 4
          %s516 = int_to_ptr.vmem [resolvable:$true] %s515
          %518 = dma.vmem_to_hbm [thread:$0]  %s516, 128, %s513, %s502
        $region56: #{tpu_custom_call.1} parent=39 // pred_fallthru
          _
      $region40: #{tpu_custom_call.1} parent=5 // pred_fallthru
        _
      %p519 = scmp.le.s32.totalorder 2, %s14
      // Predicated region
      $region57: #{tpu_custom_call.1} parent=5 // pred_check
        %p520 = pneg %p519
      $region58: #{tpu_custom_call.1} parent=5 // pred_check_branch
        %522 = sbr.rel (%p520) target = $region60
      $region59: #{tpu_custom_call.1} parent=5 // pred_region
        %s523 = ssub.s32 %s14, 2
        // Predicated region
        $region61: #{tpu_custom_call.1} parent=59 // pred_check
          %p524 = pneg %p180
        $region62: #{tpu_custom_call.1} parent=59 // pred_check_branch
          %526 = sbr.rel (%p524) target = $region64
        $region63: #{tpu_custom_call.1} parent=59 // pred_region
          %s527 = sand.u32 %s165, 1
          %s528 = scalar_lea.sflag [#allocation3], %s527
          %s529 = sand.u32 %s165, 1
          %s530 = smul.addr %s529, 8
          %s531 = scalar_lea.vmem [#allocation2], %s530
          %532 = dma.done %s528, 128
        $region64: #{tpu_custom_call.1} parent=59 // pred_fallthru
          _
      $region60: #{tpu_custom_call.1} parent=5 // pred_fallthru
        _
    $region6: #{tpu_custom_call.1} parent=1 // loop_footer
      %s18 = sadd.s32 1, %s14
    $region7: #{tpu_custom_call.1} parent=1 // loop_footer_branch
      %13 = sbr.rel target = $region3
    $region8: #{tpu_custom_call.1} parent=1 // loop_exit
      _
    %533 = vsyncpa [#allocation3], 1
    %s534 = scalar_lea.sflag [#allocation3], 1
    %535 = vsyncpa %s534, 1

</llo_original>
